<compile_context>
chip_gen: v7x
topology: tpu7x:2x2x1
jax: 0.10.0
libtpu: 0.0.40
codegen_flags: <defaults>
</compile_context>

<pallas_src>
import functools

import jax
import jax.numpy as jnp
from jax.experimental import pallas as pl
from jax.experimental.pallas import tpu as pltpu


def _round_up(a: int, b: int) -> int:
    return ((a + b - 1) // b) * b


def _cdiv(a: int, b: int) -> int:
    return (a + b - 1) // b


def _poslinear_kernel_direct(x_ref, w_ref, o_ref):
    """float32 output: accumulate straight into the resident output block."""
    @pl.when(pl.program_id(2) == 0)
    def _():
        o_ref[...] = jnp.zeros_like(o_ref)

    # abs(W) on the VPU (filler under MXU issue), matmul on the MXU, f32 acc.
    o_ref[...] += jnp.dot(
        x_ref[...], jnp.abs(w_ref[...]), preferred_element_type=jnp.float32
    )


def _poslinear_kernel_scratch(x_ref, w_ref, o_ref, acc_ref):
    """Narrow output dtype: f32 VMEM accumulator, cast once at the last K step."""
    @pl.when(pl.program_id(2) == 0)
    def _():
        acc_ref[...] = jnp.zeros_like(acc_ref)

    acc_ref[...] += jnp.dot(
        x_ref[...], jnp.abs(w_ref[...]), preferred_element_type=jnp.float32
    )

    @pl.when(pl.program_id(2) == pl.num_programs(2) - 1)
    def _():
        o_ref[...] = acc_ref[...].astype(o_ref.dtype)


@functools.partial(jax.jit, static_argnames=("tm", "tn", "tk", "compute_dtype"))
def pos_linear(x, weight, *, tm=512, tn=None, tk=512, compute_dtype=jnp.bfloat16):
    """Compute x @ abs(weight) with a tiled Pallas TPU kernel.

    x: [..., in_dim]  (leading dims flattened to M)
    weight: [in_dim, out_dim]
    compute_dtype: dtype fed to the MXU (default bf16 fast path, f32 acc).
                   None keeps the input dtype end to end.
    returns: [..., out_dim] in x.dtype
    """
    orig_shape = x.shape
    in_dim, out_dim = weight.shape
    out_dtype = x.dtype
    x2d = x.reshape(-1, in_dim)
    M = x2d.shape[0]

    if compute_dtype is None:
        compute_dtype = x2d.dtype
    x2d = x2d.astype(compute_dtype)
    weight = weight.astype(compute_dtype)

    comp_size = jnp.dtype(compute_dtype).itemsize
    out_size = jnp.dtype(out_dtype).itemsize
    sublane = max(8, 32 // comp_size)  # 8 for f32, 16 for bf16, 32 for int8/fp8

    if tn is None:
        tn = 1024 if comp_size <= 2 else 512

    # ---- tile sizes (clamped to the problem, HW-aligned) -------------------
    tm = _round_up(min(tm, _round_up(M, sublane)), sublane)
    tn = _round_up(min(tn, _round_up(out_dim, 128)), 128)
    if in_dim <= 1024:
        # Single K step with minimal K padding.
        tk = _round_up(in_dim, 128)
    else:
        tk = _round_up(min(tk, _round_up(in_dim, 128)), 128)

    Kp = _round_up(in_dim, tk)          # K padded to a tile multiple (exactness)
    Np = _round_up(out_dim, 128)        # N padded to lane width (dense stores)

    # Keep >=2 (M,N) tiles when possible so both v7x TensorCores get work.
    while _cdiv(M, tm) * _cdiv(Np, tn) < 2:
        if tn > 128:
            tn = max(128, _round_up(tn // 2, 128))
        elif tm > sublane:
            tm = max(sublane, _round_up(tm // 2, sublane))
        else:
            break

    # ---- padding (K only for x; K+N for the parameter) ---------------------
    # abs(0) = 0, so zero K-padding contributes nothing to the reduction.
    if Kp != in_dim:
        x2d = jnp.pad(x2d, ((0, 0), (0, Kp - in_dim)))
    if (Kp, Np) != weight.shape:
        # Parameter-side; cheap relative to activations and cacheable upstream.
        weight = jnp.pad(weight, ((0, Kp - in_dim), (0, Np - out_dim)))
    # NOTE: M is deliberately NOT padded -- the ragged last M block overhangs
    # (partial DMA in, masked partial store out), avoiding an HBM copy of x.

    grid = (_cdiv(M, tm), _cdiv(Np, tn), Kp // tk)

    direct_acc = jnp.dtype(out_dtype) == jnp.dtype(jnp.float32)
    if direct_acc:
        kernel = _poslinear_kernel_direct
        scratch_shapes = ()
        acc_bytes = 0
    else:
        kernel = _poslinear_kernel_scratch
        scratch_shapes = (pltpu.VMEM((tm, tn), jnp.float32),)
        acc_bytes = tm * tn * 4

    # VMEM budget: double-buffered inputs + output block (+ accumulator).
    footprint = (
        2 * (tm * tk + tk * tn) * comp_size + 2 * tm * tn * out_size + acc_bytes
    )
    vmem_limit = int(min(max(2 * footprint + (8 << 20), 32 << 20), 48 << 20))

    gm, gn, _ = grid
    cost = pl.CostEstimate(
        flops=2 * M * Kp * Np,
        transcendentals=0,
        bytes_accessed=(
            gn * M * Kp * comp_size        # x re-read once per N tile
            + gm * Kp * Np * comp_size     # W re-read once per M tile
            + M * Np * out_size
        ),
    )

    out = pl.pallas_call(
        kernel,
        out_shape=jax.ShapeDtypeStruct((M, Np), out_dtype),
        grid=grid,
        in_specs=[
            pl.BlockSpec((tm, tk), lambda i, j, k: (i, k)),
            pl.BlockSpec((tk, tn), lambda i, j, k: (k, j)),
        ],
        out_specs=pl.BlockSpec((tm, tn), lambda i, j, k: (i, j)),
        scratch_shapes=scratch_shapes,
        compiler_params=pltpu.CompilerParams(
            dimension_semantics=("parallel", "parallel", "arbitrary"),
            vmem_limit_bytes=vmem_limit,
        ),
        cost_estimate=cost,
    )(x2d, weight)

    if Np != out_dim:
        out = out[:, :out_dim]
    return out.reshape(*orig_shape[:-1], out_dim)


if __name__ == "__main__":
    key = jax.random.PRNGKey(0)
    kx, kw = jax.random.split(key)

    # Small shapes consistent with PosLinear's forward: batched x, 2-D weight.
    batch, seq, in_dim, out_dim = 2, 8, 32, 64
    x = jax.random.normal(kx, (batch, seq, in_dim), dtype=jnp.float32)
    # nn.Parameter(torch.randn((in_dim, out_dim))) -> standard normal init
    weight = jax.random.normal(kw, (in_dim, out_dim), dtype=jnp.float32)

    y_ref = jnp.einsum("bsk,kn->bsn", x, jnp.abs(weight))

    # Fast path (default): bf16 MXU compute, f32 accumulation, f32 output.
    y_fast = pos_linear(x, weight)
    jax.block_until_ready(y_fast)
    assert y_fast.shape == (batch, seq, out_dim)
    assert y_fast.dtype == x.dtype
    assert jnp.allclose(y_fast, y_ref, atol=2e-1, rtol=5e-2)

    # Full-precision path: keep the input dtype (f32) end to end.
    y_exact = pos_linear(x, weight, compute_dtype=None)
    jax.block_until_ready(y_exact)
    assert jnp.allclose(y_exact, y_ref, atol=2e-4, rtol=2e-4)

    print("KERNEL_OK")
</pallas_src>

<mosaic_0001>
module attributes {stable_mosaic.version = 11 : i64} {
  func.func @_poslinear_kernel_direct(%arg0: i32, %arg1: i32, %arg2: i32, %arg3: memref<16x128xbf16, #tpu.memory_space<vmem>>, %arg4: memref<128x128xbf16, #tpu.memory_space<vmem>>, %arg5: memref<16x128xf32, #tpu.memory_space<vmem>>) attributes {dimension_semantics = [#tpu.dimension_semantics<parallel>, #tpu.dimension_semantics<parallel>, #tpu.dimension_semantics<arbitrary>], iteration_bounds = array<i64: 1, 1, 1>, scalar_prefetch = 0 : i64, scratch_operands = 0 : i64, tpu.core_type = #tpu.core_type<tc>, window_params = [{transform_indices = @transform_0, window_bounds = array<i64: 16, 128>}, {transform_indices = @transform_1, window_bounds = array<i64: 128, 128>}, {transform_indices = @transform_2, window_bounds = array<i64: 16, 128>}]} {
    %c0_i32 = arith.constant 0 : i32
    %0 = arith.cmpi eq, %arg2, %c0_i32 : i32
    %1 = arith.extui %0 : i1 to i32
    %c0_i32_0 = arith.constant 0 : i32
    %2 = arith.cmpi ne, %1, %c0_i32_0 : i32
    scf.if %2 {
      %cst_8 = arith.constant 0.000000e+00 : f32
      %10 = vector.broadcast %cst_8 : f32 to vector<16x128xf32>
      %c0_9 = arith.constant 0 : index
      %c0_10 = arith.constant 0 : index
      %11 = vector.load %arg5[%c0_9, %c0_10] : memref<16x128xf32, #tpu.memory_space<vmem>>, vector<16x128xf32>
      tpu.vector_store %arg5[%c0_9, %c0_10], %10 {strides = array<i32>} : memref<16x128xf32, #tpu.memory_space<vmem>>, vector<16x128xf32>,
    } else {
    }
    %c0 = arith.constant 0 : index
    %c0_1 = arith.constant 0 : index
    %3 = vector.load %arg5[%c0, %c0_1] : memref<16x128xf32, #tpu.memory_space<vmem>>, vector<16x128xf32>
    %c0_2 = arith.constant 0 : index
    %c0_3 = arith.constant 0 : index
    %4 = vector.load %arg3[%c0_2, %c0_3] : memref<16x128xbf16, #tpu.memory_space<vmem>>, vector<16x128xbf16>
    %c0_4 = arith.constant 0 : index
    %c0_5 = arith.constant 0 : index
    %5 = vector.load %arg4[%c0_4, %c0_5] : memref<128x128xbf16, #tpu.memory_space<vmem>>, vector<128x128xbf16>
    %6 = math.absf %5 : vector<128x128xbf16>
    %cst = arith.constant dense<0.000000e+00> : vector<16x128xf32>
    %7 = tpu.matmul %4, %6, %cst {dimension_numbers = #tpu.dot_dimension_numbers<[1], [0], [0], [1], [0, 0, 1, 1], [], []>} : vector<16x128xbf16>, vector<128x128xbf16>, vector<16x128xf32> -> vector<16x128xf32>
    %8 = arith.addf %3, %7 : vector<16x128xf32>
    %c0_6 = arith.constant 0 : index
    %c0_7 = arith.constant 0 : index
    %9 = vector.load %arg5[%c0_6, %c0_7] : memref<16x128xf32, #tpu.memory_space<vmem>>, vector<16x128xf32>
    tpu.vector_store %arg5[%c0_6, %c0_7], %8 {strides = array<i32>} : memref<16x128xf32, #tpu.memory_space<vmem>>, vector<16x128xf32>,
    return
  }
  func.func @transform_0(%arg0: i32, %arg1: i32, %arg2: i32) -> (i32, i32) {
    %c0_i32 = arith.constant 0 : i32
    return %arg0, %arg2 : i32, i32
  }
  func.func @transform_1(%arg0: i32, %arg1: i32, %arg2: i32) -> (i32, i32) {
    %c0_i32 = arith.constant 0 : i32
    return %arg2, %arg1 : i32, i32
  }
  func.func @transform_2(%arg0: i32, %arg1: i32, %arg2: i32) -> (i32, i32) {
    %c0_i32 = arith.constant 0 : i32
    return %arg0, %arg1 : i32, i32
  }
}

</mosaic_0001>

<llo_original>
// kernel: pos_linear.1
$region0: #{pos_linear.1}
  #allocation0 [shape = 'u32[]', space=smem, size = 0x4, offset = 0x4, fixed_abs, tag = 'smem constant byte address 0x4 - core index']
  #allocation1 [shape = 'u32[144,128]{1,0:T(1,128)}', space=vmem, size = 0x12000, scoped, tag = 'internal scratch']
  %s0 = inlined_call_operand.vmem [shape: bf16[16,128], index: 0, kind: input, shape index: {}]
  %s1 = inlined_call_operand.vmem [shape: bf16[128,128], index: 1, kind: input, shape index: {}]
  %s2 = inlined_call_operand.vmem [shape: f32[16,128], index: 2, kind: output, shape index: {}]
  %s3 = sld [smem:[#allocation0]]
  $region22: #{pos_linear.1} parent=0
    _
  %s5 = ssub.s32 1, %s3
  %s6 = scalar_select 0, %s5, %s3
  // Predicated region
  $region2: #{pos_linear.1} parent=0 // pred_check
    _
  $region3: #{pos_linear.1} parent=0 // pred_check_branch
    %8 = sbr.rel (0) target = $region5
  $region4: #{pos_linear.1} parent=0 // pred_region
    _
  $region5: #{pos_linear.1} parent=0 // pred_fallthru
    _
  // Predicated region
  $region6: #{pos_linear.1} parent=0 // pred_check
    _
  $region7: #{pos_linear.1} parent=0 // pred_check_branch
    %10 = sbr.rel (0) target = $region9
  $region8: #{pos_linear.1} parent=0 // pred_region
    _
  $region9: #{pos_linear.1} parent=0 // pred_fallthru
    _
  %p12 = scmp.eq.s32.totalorder 0, 0
  // Predicated region
  $region10: #{pos_linear.1} parent=0 // pred_check
    %p13 = pneg %p12
  $region11: #{pos_linear.1} parent=0 // pred_check_branch
    %15 = sbr.rel (%p13) target = $region13
  $region12: #{pos_linear.1} parent=0 // pred_region
    %16 = vst [vmem:[%s2] sm:$0xff] 0.0
    %17 = vst [vmem:[%s2 + $0x8] sm:$0xff] 0.0
  $region13: #{pos_linear.1} parent=0 // pred_fallthru
    _
  %v18 = vld [vmem:[%s2] sm:$0xff]
  %v19 = vld [vmem:[%s2 + $0x8] sm:$0xff]
  %v20 = vld [vmem:[%s0] sm:$0xf]
  %v21 = vld [vmem:[%s0 + $0x4] sm:$0xf]
  %v22 = vld [vmem:[%s1] sm:$0xf]
  %v23 = vld [vmem:[%s1 + $0x4] sm:$0xf]
  %v24 = vld [vmem:[%s1 + $0x8] sm:$0xf]
  %v25 = vld [vmem:[%s1 + $0xc] sm:$0xf]
  %v26 = vld [vmem:[%s1 + $0x10] sm:$0xf]
  %v27 = vld [vmem:[%s1 + $0x14] sm:$0xf]
  %v28 = vld [vmem:[%s1 + $0x18] sm:$0xf]
  %v29 = vld [vmem:[%s1 + $0x1c] sm:$0xf]
  %v30 = vld [vmem:[%s1 + $0x20] sm:$0xf]
  %v31 = vld [vmem:[%s1 + $0x24] sm:$0xf]
  %v32 = vld [vmem:[%s1 + $0x28] sm:$0xf]
  %v33 = vld [vmem:[%s1 + $0x2c] sm:$0xf]
  %v34 = vld [vmem:[%s1 + $0x30] sm:$0xf]
  %v35 = vld [vmem:[%s1 + $0x34] sm:$0xf]
  %v36 = vld [vmem:[%s1 + $0x38] sm:$0xf]
  %v37 = vld [vmem:[%s1 + $0x3c] sm:$0xf]
  %v38 = vand.u32 2147450879, %v22
  %v39 = vand.u32 2147450879, %v23
  %v40 = vand.u32 2147450879, %v24
  %v41 = vand.u32 2147450879, %v25
  %v42 = vand.u32 2147450879, %v26
  %v43 = vand.u32 2147450879, %v27
  %v44 = vand.u32 2147450879, %v28
  %v45 = vand.u32 2147450879, %v29
  %v46 = vand.u32 2147450879, %v30
  %v47 = vand.u32 2147450879, %v31
  %v48 = vand.u32 2147450879, %v32
  %v49 = vand.u32 2147450879, %v33
  %v50 = vand.u32 2147450879, %v34
  %v51 = vand.u32 2147450879, %v35
  %v52 = vand.u32 2147450879, %v36
  %v53 = vand.u32 2147450879, %v37
  %v56 = vunpack.c.l.b16 %v20
  %v57 = vunpack.c.l.b16 %v21
  %v58 = vpack.c.b16 %v57, %v56
  %v76 = vunpack.c.l.b16 %v38
  %v77 = vunpack.c.l.b16 %v39
  %v78 = vunpack.c.l.b16 %v40
  %v79 = vunpack.c.l.b16 %v41
  %v80 = vunpack.c.l.b16 %v42
  %v81 = vunpack.c.l.b16 %v43
  %v82 = vunpack.c.l.b16 %v44
  %v83 = vunpack.c.l.b16 %v45
  %v84 = vunpack.c.l.b16 %v46
  %v85 = vunpack.c.l.b16 %v47
  %v86 = vunpack.c.l.b16 %v48
  %v87 = vunpack.c.l.b16 %v49
  %v88 = vunpack.c.l.b16 %v50
  %v89 = vunpack.c.l.b16 %v51
  %v90 = vunpack.c.l.b16 %v52
  %v91 = vunpack.c.l.b16 %v53
  %v92 = vpack.c.b16 %v77, %v76
  %v93 = vpack.c.b16 %v79, %v78
  %v94 = vpack.c.b16 %v81, %v80
  %v95 = vpack.c.b16 %v83, %v82
  %v96 = vpack.c.b16 %v85, %v84
  %v97 = vpack.c.b16 %v87, %v86
  %v98 = vpack.c.b16 %v89, %v88
  %v99 = vpack.c.b16 %v91, %v90
  %108 = vmatprep.subr.bf16.mxu0 0
  %109 = vmatpush1.bf16.msra.mxu0 %v92
  %110 = vmatprep.subr.bf16.mxu0 0
  %111 = vmatpush1.bf16.msra.mxu0 %v93
  %112 = vmatprep.subr.bf16.mxu0 0
  %113 = vmatpush1.bf16.msra.mxu0 %v94
  %114 = vmatprep.subr.bf16.mxu0 0
  %115 = vmatpush1.bf16.msra.mxu0 %v95
  %116 = vmatprep.subr.bf16.mxu0 0
  %117 = vmatpush1.bf16.msra.mxu0 %v96
  %118 = vmatprep.subr.bf16.mxu0 0
  %119 = vmatpush1.bf16.msra.mxu0 %v97
  %120 = vmatprep.subr.bf16.mxu0 0
  %121 = vmatpush1.bf16.msra.mxu0 %v98
  %122 = vmatprep.subr.bf16.mxu0 0
  %123 = vmatpush1.bf16.msra.mxu0 %v99
  %124 = vmatprep.subr.bf16.mxu0 0
  %125 = vmatpush1.bf16.msra.mxu0 0
  %126 = vmatprep.subr.bf16.mxu0 0
  %127 = vmatpush1.bf16.msra.mxu0 0
  %128 = vmatprep.subr.bf16.mxu0 0
  %129 = vmatpush1.bf16.msra.mxu0 0
  %130 = vmatprep.subr.bf16.mxu0 0
  %131 = vmatpush1.bf16.msra.mxu0 0
  %132 = vmatprep.subr.bf16.mxu0 0
  %133 = vmatpush1.bf16.msra.mxu0 0
  %134 = vmatprep.subr.bf16.mxu0 0
  %135 = vmatpush1.bf16.msra.mxu0 0
  %136 = vmatprep.subr.bf16.mxu0 0
  %137 = vmatpush1.bf16.msra.mxu0 0
  %138 = vmatprep.subr.bf16.mxu0 0
  %139 = vmatpush1.bf16.msra.mxu0 0
  %140 = vmatprep.mubr.bf16.mxu0 0
  %141 = vmatmul.mubr.bf16.gmra.mrb[0].mxu0 %v58
  %v142 = vpop.f32.mrb[0].mxu0
  %v143 = vadd.f32 0.0, %v142
  %v144 = vpop.f32.mrb[0].mxu0
  %v145 = vpop.f32.mrb[0].mxu0
  %v146 = vadd.f32 0.0, %v145
  %v147 = vpop.f32.mrb[0].mxu0
  %148 = vdwg.mxu0
  %v149 = vadd.f32 %v18, %v143
  %v150 = vadd.f32 %v19, %v146
  %151 = vst [vmem:[%s2] sm:$0xff] %v149
  %152 = vst [vmem:[%s2 + $0x8] sm:$0xff] %v150
  // Predicated region
  $region14: #{pos_linear.1} parent=0 // pred_check
    _
  $region15: #{pos_linear.1} parent=0 // pred_check_branch
    %154 = sbr.rel (0) target = $region17
  $region16: #{pos_linear.1} parent=0 // pred_region
    _
  $region17: #{pos_linear.1} parent=0 // pred_fallthru
    _
  // Predicated region
  $region18: #{pos_linear.1} parent=0 // pred_check
    _
  $region19: #{pos_linear.1} parent=0 // pred_check_branch
    %156 = sbr.rel (0) target = $region21
  $region20: #{pos_linear.1} parent=0 // pred_region
    _
  $region21: #{pos_linear.1} parent=0 // pred_fallthru
    _

</llo_original>
